<compile_context>
chip_gen: v7x
topology: tpu7x:2x2x1
jax: 0.10.0
libtpu: 0.0.40
codegen_flags: <defaults>
</compile_context>

<pallas_src>
import jax
import jax.numpy as jnp
from jax import lax
from jax.experimental import pallas as pl
from jax.experimental.pallas import tpu as pltpu

C_PAD = 128  # lane-dense classifier width inside the kernel


def _softplus_thresh20(x):
    # PyTorch F.softplus(x, beta=1, threshold=20): identity where x > 20.
    # The jnp.minimum guard keeps exp from overflowing on the untaken branch.
    return jnp.where(x > 20.0, x, jnp.log1p(jnp.exp(jnp.minimum(x, 20.0))))


# ---------------------------------------------------------------------------
# Fused kernel:
#   step 0 (x-independent, resident across the batch grid):
#     weight_var = softplus(weight_logvar)^2              (C, L)
#     bias_var   = softplus(bias_logvar)^2                (1, C)
#     wpad       = zero-pad(weight_mu) to (C_PAD, L)      (scratch)
#     bpad       = zero-pad(bias_mu row) to (1, C_PAD)    (scratch)
#   every step (hot path):
#     out[block] = x[block] @ wpad.T + bpad               (block_b, C_PAD)
# ---------------------------------------------------------------------------
def _fused_kernel(x_ref, wmu_ref, wlv_ref, bmu_ref, blv_ref,   # inputs
                  out_ref, wvar_ref, bvar_ref,                 # outputs
                  wpad_ref, bpad_ref):                         # VMEM scratch
    C, L = wmu_ref.shape

    @pl.when(pl.program_id(0) == 0)
    def _():
        # Parameter variances (VPU/EUP work, hidden under the MXU op).
        wsig = _softplus_thresh20(wlv_ref[...])
        wvar_ref[...] = wsig * wsig
        bsig = _softplus_thresh20(blv_ref[...])
        bvar_ref[...] = bsig * bsig
        # Lane-dense padded copies of the classifier params.
        wpad_ref[...] = jnp.zeros_like(wpad_ref)
        wpad_ref[0:C, :] = wmu_ref[...]
        bpad_ref[...] = jnp.zeros_like(bpad_ref)
        bpad_ref[0:1, 0:C] = bmu_ref[...]

    # x (block_b, L) contracted with wpad (C_PAD, L) on axis 1 of both
    # == x @ W_pad.T ; no wrapper transpose, output is lane-dense (x, 128).
    out_ref[...] = (
        lax.dot_general(
            x_ref[...], wpad_ref[...],
            dimension_numbers=(((1,), (1,)), ((), ())),
            preferred_element_type=jnp.float32,
        )
        + bpad_ref[...]
    )


@jax.jit
def task_specific_network_forward(x, weight_mu, weight_logvar, bias_mu, bias_logvar):
    """Eval-mode forward of task_specific_network (classifier_bias=True).

    Returns (output, weight_mu, weight_var, bias_mu, bias_var), matching the
    PyTorch module.
    """
    B, L = x.shape
    C = weight_mu.shape[0]

    # x-independent layout plumbing: bias params presented lane-dense as
    # (1, C) rows (cached with the params in a real serving loop).
    bmu_row = bias_mu.reshape(1, C)
    blv_row = bias_logvar.reshape(1, C)

    # Batch tiling: single block for small B, 512-row blocks for large B.
    block_b = B if B <= 512 else 512
    grid = (pl.cdiv(B, block_b),)

    out_padded, weight_var, bvar_row = pl.pallas_call(
        _fused_kernel,
        out_shape=(
            jax.ShapeDtypeStruct((B, C_PAD), jnp.float32),
            jax.ShapeDtypeStruct((C, L), jnp.float32),
            jax.ShapeDtypeStruct((1, C), jnp.float32),
        ),
        grid=grid,
        in_specs=[
            pl.BlockSpec((block_b, L), lambda i: (i, 0)),   # x, tiled over batch
            pl.BlockSpec((C, L), lambda i: (0, 0)),         # weight_mu
            pl.BlockSpec((C, L), lambda i: (0, 0)),         # weight_logvar
            pl.BlockSpec((1, C), lambda i: (0, 0)),         # bias_mu row
            pl.BlockSpec((1, C), lambda i: (0, 0)),         # bias_logvar row
        ],
        out_specs=[
            pl.BlockSpec((block_b, C_PAD), lambda i: (i, 0)),  # lane-dense output
            pl.BlockSpec((C, L), lambda i: (0, 0)),            # weight_var
            pl.BlockSpec((1, C), lambda i: (0, 0)),            # bias_var row
        ],
        scratch_shapes=[
            pltpu.VMEM((C_PAD, L), jnp.float32),   # padded weight
            pltpu.VMEM((1, C_PAD), jnp.float32),   # padded bias row
        ],
        compiler_params=pltpu.CompilerParams(
            # "arbitrary": the variance/scratch state is written at step 0 and
            # stays resident across the batch grid.  Use "parallel" only if the
            # variance outputs are hoisted out (then v7x gets the second TC).
            dimension_semantics=("arbitrary",),
        ),
        cost_estimate=pl.CostEstimate(
            flops=2 * B * C_PAD * L + B * C_PAD + C * L + C,
            transcendentals=2 * (C * L + C),
            bytes_accessed=4 * (B * L + 3 * C * L + 3 * C + B * C_PAD),
        ),
    )(x, weight_mu, weight_logvar, bmu_row, blv_row)

    output = out_padded[:, :C]            # slice padded lanes away outside
    bias_var = bvar_row.reshape(C, 1)     # back to PyTorch (d_class, 1) layout
    return output, weight_mu, weight_var, bias_mu, bias_var


# ---------------------------------------------------------------------------
# Pure-JAX reference for correctness checking.
# ---------------------------------------------------------------------------
def _reference(x, weight_mu, weight_logvar, bias_mu, bias_logvar):
    sp = lambda v: jnp.where(v > 20.0, v, jnp.log1p(jnp.exp(jnp.minimum(v, 20.0))))
    weight_var = sp(weight_logvar) ** 2
    bias_var = sp(bias_logvar) ** 2
    output = x @ weight_mu.T + bias_mu.reshape(1, -1)
    return output, weight_mu, weight_var, bias_mu, bias_var


if __name__ == "__main__":
    # Small shapes consistent with the module: batch=8, d_class=16, d_latent=32.
    B, d_class, d_latent = 8, 16, 32
    key = jax.random.PRNGKey(0)
    k_x, k_wm, k_wl, k_bm, k_bl = jax.random.split(key, 5)

    rho = -3.0
    x = jax.random.normal(k_x, (B, d_latent), dtype=jnp.float32)
    weight_mu = 0.1 * jax.random.normal(k_wm, (d_class, d_latent), dtype=jnp.float32)
    weight_logvar = rho + 0.1 * jax.random.normal(k_wl, (d_class, d_latent), dtype=jnp.float32)
    bias_mu = 0.1 * jax.random.normal(k_bm, (d_class, 1), dtype=jnp.float32)
    bias_logvar = rho + 0.1 * jax.random.normal(k_bl, (d_class, 1), dtype=jnp.float32)

    outs = task_specific_network_forward(x, weight_mu, weight_logvar, bias_mu, bias_logvar)
    outs = jax.block_until_ready(outs)

    refs = _reference(x, weight_mu, weight_logvar, bias_mu, bias_logvar)
    names = ("output", "weight_mu", "weight_var", "bias_mu", "bias_var")
    for name, o, r in zip(names, outs, refs):
        assert o.shape == r.shape, (name, o.shape, r.shape)
        assert jnp.allclose(o, r, atol=1e-5, rtol=1e-5), f"mismatch vs reference: {name}"

    print("KERNEL_OK")
</pallas_src>

<mosaic_0001>
module attributes {stable_mosaic.version = 11 : i64} {
  func.func @_fused_kernel(%arg0: i32, %arg1: memref<8x32xf32, #tpu.memory_space<vmem>>, %arg2: memref<16x32xf32, #tpu.memory_space<vmem>>, %arg3: memref<16x32xf32, #tpu.memory_space<vmem>>, %arg4: memref<1x16xf32, #tpu.memory_space<vmem>>, %arg5: memref<1x16xf32, #tpu.memory_space<vmem>>, %arg6: memref<8x128xf32, #tpu.memory_space<vmem>>, %arg7: memref<16x32xf32, #tpu.memory_space<vmem>>, %arg8: memref<1x16xf32, #tpu.memory_space<vmem>>, %arg9: memref<128x32xf32, #tpu.memory_space<vmem>>, %arg10: memref<1x128xf32, #tpu.memory_space<vmem>>) attributes {dimension_semantics = [#tpu.dimension_semantics<arbitrary>], iteration_bounds = array<i64: 1>, scalar_prefetch = 0 : i64, scratch_operands = 2 : i64, tpu.core_type = #tpu.core_type<tc>, window_params = [{transform_indices = @transform_0, window_bounds = array<i64: 8, 32>}, {pipeline_mode = #tpu.pipeline_mode<synchronous>, transform_indices = @transform_1, window_bounds = array<i64: 16, 32>}, {pipeline_mode = #tpu.pipeline_mode<synchronous>, transform_indices = @transform_2, window_bounds = array<i64: 16, 32>}, {pipeline_mode = #tpu.pipeline_mode<synchronous>, transform_indices = @transform_3, window_bounds = array<i64: 1, 16>}, {pipeline_mode = #tpu.pipeline_mode<synchronous>, transform_indices = @transform_4, window_bounds = array<i64: 1, 16>}, {transform_indices = @transform_5, window_bounds = array<i64: 8, 128>}, {pipeline_mode = #tpu.pipeline_mode<synchronous>, transform_indices = @transform_6, window_bounds = array<i64: 16, 32>}, {pipeline_mode = #tpu.pipeline_mode<synchronous>, transform_indices = @transform_7, window_bounds = array<i64: 1, 16>}]} {
    %c0_i32 = arith.constant 0 : i32
    %0 = arith.cmpi eq, %arg0, %c0_i32 : i32
    %1 = arith.extui %0 : i1 to i32
    %c0_i32_0 = arith.constant 0 : i32
    %2 = arith.cmpi ne, %1, %c0_i32_0 : i32
    scf.if %2 {
      %c0_8 = arith.constant 0 : index
      %c0_9 = arith.constant 0 : index
      %10 = vector.load %arg3[%c0_8, %c0_9] : memref<16x32xf32, #tpu.memory_space<vmem>>, vector<16x32xf32>
      %cst_10 = arith.constant 2.000000e+01 : f32
      %11 = vector.broadcast %cst_10 : f32 to vector<16x32xf32>
      %12 = arith.cmpf ogt, %10, %11 : vector<16x32xf32>
      %cst_11 = arith.constant 2.000000e+01 : f32
      %13 = vector.broadcast %cst_11 : f32 to vector<16x32xf32>
      %14 = arith.minimumf %10, %13 : vector<16x32xf32>
      %15 = math.exp %14 : vector<16x32xf32>
      %16 = math.log1p %15 : vector<16x32xf32>
      %17 = arith.select %12, %10, %16 : vector<16x32xi1>, vector<16x32xf32>
      %18 = arith.mulf %17, %17 : vector<16x32xf32>
      %c0_12 = arith.constant 0 : index
      %c0_13 = arith.constant 0 : index
      %19 = vector.load %arg7[%c0_12, %c0_13] : memref<16x32xf32, #tpu.memory_space<vmem>>, vector<16x32xf32>
      tpu.vector_store %arg7[%c0_12, %c0_13], %18 {strides = array<i32>} : memref<16x32xf32, #tpu.memory_space<vmem>>, vector<16x32xf32>,
      %c0_14 = arith.constant 0 : index
      %c0_15 = arith.constant 0 : index
      %20 = vector.load %arg5[%c0_14, %c0_15] : memref<1x16xf32, #tpu.memory_space<vmem>>, vector<1x16xf32>
      %cst_16 = arith.constant 2.000000e+01 : f32
      %21 = vector.broadcast %cst_16 : f32 to vector<1x16xf32>
      %22 = arith.cmpf ogt, %20, %21 : vector<1x16xf32>
      %cst_17 = arith.constant 2.000000e+01 : f32
      %23 = vector.broadcast %cst_17 : f32 to vector<1x16xf32>
      %24 = arith.minimumf %20, %23 : vector<1x16xf32>
      %25 = math.exp %24 : vector<1x16xf32>
      %26 = math.log1p %25 : vector<1x16xf32>
      %27 = arith.select %22, %20, %26 : vector<1x16xi1>, vector<1x16xf32>
      %28 = arith.mulf %27, %27 : vector<1x16xf32>
      %c0_18 = arith.constant 0 : index
      %c0_19 = arith.constant 0 : index
      %29 = vector.load %arg8[%c0_18, %c0_19] : memref<1x16xf32, #tpu.memory_space<vmem>>, vector<1x16xf32>
      tpu.vector_store %arg8[%c0_18, %c0_19], %28 {strides = array<i32>} : memref<1x16xf32, #tpu.memory_space<vmem>>, vector<1x16xf32>,
      %cst_20 = arith.constant 0.000000e+00 : f32
      %30 = vector.broadcast %cst_20 : f32 to vector<128x32xf32>
      %c0_21 = arith.constant 0 : index
      %c0_22 = arith.constant 0 : index
      %31 = vector.load %arg9[%c0_21, %c0_22] : memref<128x32xf32, #tpu.memory_space<vmem>>, vector<128x32xf32>
      tpu.vector_store %arg9[%c0_21, %c0_22], %30 {strides = array<i32>} : memref<128x32xf32, #tpu.memory_space<vmem>>, vector<128x32xf32>,
      %c0_23 = arith.constant 0 : index
      %c0_24 = arith.constant 0 : index
      %32 = vector.load %arg2[%c0_23, %c0_24] : memref<16x32xf32, #tpu.memory_space<vmem>>, vector<16x32xf32>
      %c0_25 = arith.constant 0 : index
      %c0_26 = arith.constant 0 : index
      %33 = vector.load %arg9[%c0_25, %c0_26] : memref<128x32xf32, #tpu.memory_space<vmem>>, vector<16x32xf32>
      tpu.vector_store %arg9[%c0_25, %c0_26], %32 {strides = array<i32>} : memref<128x32xf32, #tpu.memory_space<vmem>>, vector<16x32xf32>,
      %cst_27 = arith.constant 0.000000e+00 : f32
      %34 = vector.broadcast %cst_27 : f32 to vector<1x128xf32>
      %c0_28 = arith.constant 0 : index
      %c0_29 = arith.constant 0 : index
      %35 = vector.load %arg10[%c0_28, %c0_29] : memref<1x128xf32, #tpu.memory_space<vmem>>, vector<1x128xf32>
      tpu.vector_store %arg10[%c0_28, %c0_29], %34 {strides = array<i32>} : memref<1x128xf32, #tpu.memory_space<vmem>>, vector<1x128xf32>,
      %c0_30 = arith.constant 0 : index
      %c0_31 = arith.constant 0 : index
      %36 = vector.load %arg4[%c0_30, %c0_31] : memref<1x16xf32, #tpu.memory_space<vmem>>, vector<1x16xf32>
      %c0_32 = arith.constant 0 : index
      %c0_33 = arith.constant 0 : index
      %37 = vector.load %arg10[%c0_32, %c0_33] : memref<1x128xf32, #tpu.memory_space<vmem>>, vector<1x16xf32>
      tpu.vector_store %arg10[%c0_32, %c0_33], %36 {strides = array<i32>} : memref<1x128xf32, #tpu.memory_space<vmem>>, vector<1x16xf32>,
    } else {
    }
    %c0 = arith.constant 0 : index
    %c0_1 = arith.constant 0 : index
    %3 = vector.load %arg1[%c0, %c0_1] : memref<8x32xf32, #tpu.memory_space<vmem>>, vector<8x32xf32>
    %c0_2 = arith.constant 0 : index
    %c0_3 = arith.constant 0 : index
    %4 = vector.load %arg9[%c0_2, %c0_3] : memref<128x32xf32, #tpu.memory_space<vmem>>, vector<128x32xf32>
    %cst = arith.constant dense<0.000000e+00> : vector<8x128xf32>
    %5 = tpu.matmul %3, %4, %cst {dimension_numbers = #tpu.dot_dimension_numbers<[1], [1], [0], [0], [0, 0, 1, 0], [], []>} : vector<8x32xf32>, vector<128x32xf32>, vector<8x128xf32> -> vector<8x128xf32>
    %c0_4 = arith.constant 0 : index
    %c0_5 = arith.constant 0 : index
    %6 = vector.load %arg10[%c0_4, %c0_5] : memref<1x128xf32, #tpu.memory_space<vmem>>, vector<1x128xf32>
    %7 = vector.broadcast %6 : vector<1x128xf32> to vector<8x128xf32>
    %8 = arith.addf %5, %7 : vector<8x128xf32>
    %c0_6 = arith.constant 0 : index
    %c0_7 = arith.constant 0 : index
    %9 = vector.load %arg6[%c0_6, %c0_7] : memref<8x128xf32, #tpu.memory_space<vmem>>, vector<8x128xf32>
    tpu.vector_store %arg6[%c0_6, %c0_7], %8 {strides = array<i32>} : memref<8x128xf32, #tpu.memory_space<vmem>>, vector<8x128xf32>,
    return
  }
  func.func @transform_0(%arg0: i32) -> (i32, i32) {
    %c0_i32 = arith.constant 0 : i32
    %c0_i32_0 = arith.constant 0 : i32
    return %arg0, %c0_i32 : i32, i32
  }
  func.func @transform_1(%arg0: i32) -> (i32, i32) {
    %c0_i32 = arith.constant 0 : i32
    %c0_i32_0 = arith.constant 0 : i32
    %c0_i32_1 = arith.constant 0 : i32
    return %c0_i32, %c0_i32_0 : i32, i32
  }
  func.func @transform_2(%arg0: i32) -> (i32, i32) {
    %c0_i32 = arith.constant 0 : i32
    %c0_i32_0 = arith.constant 0 : i32
    %c0_i32_1 = arith.constant 0 : i32
    return %c0_i32, %c0_i32_0 : i32, i32
  }
  func.func @transform_3(%arg0: i32) -> (i32, i32) {
    %c0_i32 = arith.constant 0 : i32
    %c0_i32_0 = arith.constant 0 : i32
    %c0_i32_1 = arith.constant 0 : i32
    return %c0_i32, %c0_i32_0 : i32, i32
  }
  func.func @transform_4(%arg0: i32) -> (i32, i32) {
    %c0_i32 = arith.constant 0 : i32
    %c0_i32_0 = arith.constant 0 : i32
    %c0_i32_1 = arith.constant 0 : i32
    return %c0_i32, %c0_i32_0 : i32, i32
  }
  func.func @transform_5(%arg0: i32) -> (i32, i32) {
    %c0_i32 = arith.constant 0 : i32
    %c0_i32_0 = arith.constant 0 : i32
    return %arg0, %c0_i32 : i32, i32
  }
  func.func @transform_6(%arg0: i32) -> (i32, i32) {
    %c0_i32 = arith.constant 0 : i32
    %c0_i32_0 = arith.constant 0 : i32
    %c0_i32_1 = arith.constant 0 : i32
    return %c0_i32, %c0_i32_0 : i32, i32
  }
  func.func @transform_7(%arg0: i32) -> (i32, i32) {
    %c0_i32 = arith.constant 0 : i32
    %c0_i32_0 = arith.constant 0 : i32
    %c0_i32_1 = arith.constant 0 : i32
    return %c0_i32, %c0_i32_0 : i32, i32
  }
}

</mosaic_0001>

<llo_original>
// kernel: task_specific_network_forward.1
$region0: #{task_specific_network_forward.1}
  #allocation0 [shape = 'u32[]', space=smem, size = 0x4, offset = 0x4, fixed_abs, tag = 'smem constant byte address 0x4 - core index']
  #allocation1 [shape = 'u32[144,128]{1,0:T(1,128)}', space=vmem, size = 0x12000, scoped, tag = 'internal scratch']
  #allocation2 [shape = 'f32[128,32]{1,0:T(8,128)}', space=vmem, size = 0x10000, scoped, tag = 'scratch operand']
  #allocation3 [shape = 'f32[1,128]{1,0:T(1,128)}', space=vmem, size = 0x200, scoped, tag = 'scratch operand']
  %s0 = inlined_call_operand.hbm [shape: f32[8,32], index: 0, kind: input, shape index: {}]
  %s1 = inlined_call_operand.vmem [shape: f32[16,32], index: 1, kind: input, shape index: {}]
  %s2 = inlined_call_operand.hbm [shape: f32[16,32], index: 2, kind: input, shape index: {}]
  %s3 = inlined_call_operand.vmem [shape: f32[1,16], index: 3, kind: input, shape index: {}]
  %s4 = inlined_call_operand.vmem [shape: f32[1,16], index: 4, kind: input, shape index: {}]
  %s5 = inlined_call_operand.hbm [shape: f32[8,128], index: 5, kind: output, shape index: {0}]
  %s6 = inlined_call_operand.hbm [shape: f32[16,32], index: 6, kind: output, shape index: {1}]
  %s7 = inlined_call_operand.hbm [shape: f32[1,16], index: 7, kind: output, shape index: {2}]
  %8 = xla_tuple %s5, %s6, %s7
  %s9 = sld [smem:[#allocation0]]
  $region58: #{task_specific_network_forward.1} parent=0
    _
  %s11 = ssub.s32 1, %s9
  %s12 = scalar_select 0, %s11, %s9
  $region1: #{task_specific_network_forward.1} parent=0
    #allocation4 [shape = 'u8[4096]{0}', space=vmem, size = 0x1000, scoped, tag = 'input window, operand 0, single buffered']
    #allocation5 [shape = 's32[1]{0}', space=sflag, size = 0x4, scoped, tag = 'scoped memory for task_specific_network_forward.1']
    #allocation6 [shape = 's32[1]{0}', space=sflag, size = 0x4, scoped, tag = 'scoped memory for task_specific_network_forward.1']
    #allocation7 [shape = 'u8[8192]{0}', space=vmem, size = 0x2000, scoped, tag = 'input window, operand 2, single buffered']
    #allocation8 [shape = 's32[1]{0}', space=sflag, size = 0x4, scoped, tag = 'scoped memory for task_specific_network_forward.1']
    #allocation9 [shape = 'u8[4096]{0}', space=vmem, size = 0x1000, scoped, tag = 'output window, operand 0, single buffered']
    #allocation10 [shape = 'u8[8192]{0}', space=vmem, size = 0x2000, scoped, tag = 'output window, operand 1, single buffered']
    #allocation11 [shape = 's32[1]{0}', space=sflag, size = 0x4, scoped, tag = 'scoped memory for task_specific_network_forward.1']
    #allocation12 [shape = 'u8[512]{0}', space=vmem, size = 0x400, scoped, tag = 'output window, operand 2, single buffered']
    %13 = vsyncpa [#allocation5], 0
    %14 = vsyncpa [#allocation8], 0
    %15 = vsyncpa [#allocation6], 0
    %16 = vsyncpa [#allocation11], 0
    // Predicated region
    $region2: #{task_specific_network_forward.1} parent=1 // pred_check
      _
    $region3: #{task_specific_network_forward.1} parent=1 // pred_check_branch
      %18 = sbr.rel (0) target = $region5
    $region4: #{task_specific_network_forward.1} parent=1 // pred_region
      %s20 = ssub.s32 128, 128
      %21 = vsyncadd [#allocation5], %s20
      %s23 = sshll.u32 [#allocation4], 4
      %s24 = int_to_ptr.vmem [resolvable:$true] %s23
      %26 = dma.hbm_to_vmem [thread:$0]  %s0, 128, %s24, [#allocation5]
    $region5: #{task_specific_network_forward.1} parent=1 // pred_fallthru
      _
    // Predicated region
    $region6: #{task_specific_network_forward.1} parent=1 // pred_check
      _
    $region7: #{task_specific_network_forward.1} parent=1 // pred_check_branch
      %28 = sbr.rel (0) target = $region9
    $region8: #{task_specific_network_forward.1} parent=1 // pred_region
      _
    $region9: #{task_specific_network_forward.1} parent=1 // pred_fallthru
      _
    // Predicated region
    $region10: #{task_specific_network_forward.1} parent=1 // pred_check
      _
    $region11: #{task_specific_network_forward.1} parent=1 // pred_check_branch
      %30 = sbr.rel (0) target = $region13
    $region12: #{task_specific_network_forward.1} parent=1 // pred_region
      %s32 = ssub.s32 256, 256
      %33 = vsyncadd [#allocation8], %s32
      %s34 = sshll.u32 [#allocation7], 4
      %s35 = int_to_ptr.vmem [resolvable:$true] %s34
      %40 = dma.hbm_to_vmem [thread:$0]  %s2, 256, %s35, [#allocation8], 128, 128, 8
    $region13: #{task_specific_network_forward.1} parent=1 // pred_fallthru
      _
    // Predicated region
    $region14: #{task_specific_network_forward.1} parent=1 // pred_check
      _
    $region15: #{task_specific_network_forward.1} parent=1 // pred_check_branch
      %42 = sbr.rel (0) target = $region17
    $region16: #{task_specific_network_forward.1} parent=1 // pred_region
      _
    $region17: #{task_specific_network_forward.1} parent=1 // pred_fallthru
      _
    // Predicated region
    $region18: #{task_specific_network_forward.1} parent=1 // pred_check
      _
    $region19: #{task_specific_network_forward.1} parent=1 // pred_check_branch
      %44 = sbr.rel (0) target = $region21
    $region20: #{task_specific_network_forward.1} parent=1 // pred_region
      _
    $region21: #{task_specific_network_forward.1} parent=1 // pred_fallthru
      _
    // Predicated region
    $region22: #{task_specific_network_forward.1} parent=1 // pred_check
      _
    $region23: #{task_specific_network_forward.1} parent=1 // pred_check_branch
      %46 = sbr.rel (0) target = $region25
    $region24: #{task_specific_network_forward.1} parent=1 // pred_region
      %47 = dma.done [#allocation5], 128
    $region25: #{task_specific_network_forward.1} parent=1 // pred_fallthru
      _
    // Predicated region
    $region26: #{task_specific_network_forward.1} parent=1 // pred_check
      _
    $region27: #{task_specific_network_forward.1} parent=1 // pred_check_branch
      %49 = sbr.rel (0) target = $region29
    $region28: #{task_specific_network_forward.1} parent=1 // pred_region
      %50 = dma.done [#allocation8], 256
    $region29: #{task_specific_network_forward.1} parent=1 // pred_fallthru
      _
    %p51 = scmp.eq.s32.totalorder 0, 0
    // Predicated region
    $region30: #{task_specific_network_forward.1} parent=1 // pred_check
      %p52 = pneg %p51
    $region31: #{task_specific_network_forward.1} parent=1 // pred_check_branch
      %54 = sbr.rel (%p52) target = $region33
    $region32: #{task_specific_network_forward.1} parent=1 // pred_region
      %v55 = vld [vmem:[#allocation7] sm:$0xff]
      %v56 = vld [vmem:[#allocation7 + $0x8] sm:$0xff]
      %vm57 = vcmp.gt.f32.partialorder %v55, 20.0
      %vm58 = vcmp.gt.f32.partialorder %v56, 20.0
      %v59 = vmin.f32 %v55, 20.0
      %v60 = vmin.f32 %v56, 20.0
      %v61 = vmul.f32 %v59, 1.442695
      %v62 = vpow.pop %v61
      %v63 = vmul.f32 %v60, 1.442695
      %v64 = vpow.pop %v63
      %v65 = vadd.f32 %v62, 1.0
      %v66 = vlog2.pop %v65
      %v67 = vmul.f32 %v66, 0.6931472
      %v68 = vmul.f32 -0.5, %v62
      %v69 = vadd.f32 %v68, 1.0
      %v70 = vmul.f32 %v69, %v62
      %v71 = vand.u32 2147483647, %v62
      %vm72 = vcmp.lt.f32.partialorder %v71, 0.0004427343
      %v73 = vsel %vm72, %v70, %v67
      %v74 = vadd.f32 %v64, 1.0
      %v75 = vlog2.pop %v74
      %v76 = vmul.f32 %v75, 0.6931472
      %v77 = vmul.f32 -0.5, %v64
      %v78 = vadd.f32 %v77, 1.0
      %v79 = vmul.f32 %v78, %v64
      %v80 = vand.u32 2147483647, %v64
      %vm81 = vcmp.lt.f32.partialorder %v80, 0.0004427343
      %v82 = vsel %vm81, %v79, %v76
      %v83 = vsel %vm57, %v55, %v73
      %v84 = vsel %vm58, %v56, %v82
      %v85 = vmul.f32 %v83, %v83
      %v86 = vmul.f32 %v84, %v84
      %vm87 = vcmask 261120
      %88 = vst.msk [vmem:[#allocation10] sm:$0xff] %vm87, %v85
      %89 = vst.msk [vmem:[#allocation10 + $0x8] sm:$0xff] %vm87, %v86
      %v90 = vld [vmem:[%s4] sm:$0x1]
      %vm91 = vcmp.gt.f32.partialorder %v90, 20.0
      %v92 = vmin.f32 %v90, 20.0
      %v93 = vmul.f32 %v92, 1.442695
      %v94 = vpow.pop %v93
      %v95 = vadd.f32 %v94, 1.0
      %v96 = vlog2.pop %v95
      %v97 = vmul.f32 %v96, 0.6931472
      %v98 = vmul.f32 -0.5, %v94
      %v99 = vadd.f32 %v98, 1.0
      %v100 = vmul.f32 %v99, %v94
      %v101 = vand.u32 2147483647, %v94
      %vm102 = vcmp.lt.f32.partialorder %v101, 0.0004427343
      %v103 = vsel %vm102, %v100, %v97
      %v104 = vsel %vm91, %v90, %v103
      %v105 = vmul.f32 %v104, %v104
      %vm106 = vcmask 122880
      %107 = vst.msk [vmem:[#allocation12] sm:$0x1] %vm106, %v105
      %108 = vst.msk [vmem:[#allocation2] sm:$0xff] %vm87, 0.0
      %109 = vst.msk [vmem:[#allocation2 + $0x8] sm:$0xff] %vm87, 0.0
      %110 = vst.msk [vmem:[#allocation2 + $0x10] sm:$0xff] %vm87, 0.0
      %111 = vst.msk [vmem:[#allocation2 + $0x18] sm:$0xff] %vm87, 0.0
      %112 = vst.msk [vmem:[#allocation2 + $0x20] sm:$0xff] %vm87, 0.0
      %113 = vst.msk [vmem:[#allocation2 + $0x28] sm:$0xff] %vm87, 0.0
      %114 = vst.msk [vmem:[#allocation2 + $0x30] sm:$0xff] %vm87, 0.0
      %115 = vst.msk [vmem:[#allocation2 + $0x38] sm:$0xff] %vm87, 0.0
      %116 = vst.msk [vmem:[#allocation2 + $0x40] sm:$0xff] %vm87, 0.0
      %117 = vst.msk [vmem:[#allocation2 + $0x48] sm:$0xff] %vm87, 0.0
      %118 = vst.msk [vmem:[#allocation2 + $0x50] sm:$0xff] %vm87, 0.0
      %119 = vst.msk [vmem:[#allocation2 + $0x58] sm:$0xff] %vm87, 0.0
      %120 = vst.msk [vmem:[#allocation2 + $0x60] sm:$0xff] %vm87, 0.0
      %121 = vst.msk [vmem:[#allocation2 + $0x68] sm:$0xff] %vm87, 0.0
      %122 = vst.msk [vmem:[#allocation2 + $0x70] sm:$0xff] %vm87, 0.0
      %123 = vst.msk [vmem:[#allocation2 + $0x78] sm:$0xff] %vm87, 0.0
      %v124 = vld [vmem:[%s1] sm:$0xff]
      %v125 = vld [vmem:[%s1 + $0x8] sm:$0xff]
      %126 = vst.msk [vmem:[#allocation2] sm:$0xff] %vm87, %v124
      %127 = vst.msk [vmem:[#allocation2 + $0x8] sm:$0xff] %vm87, %v125
      %128 = vst [vmem:[#allocation3] sm:$0x1] 0.0
      %v129 = vld [vmem:[%s3] sm:$0x1]
      %130 = vst.msk [vmem:[#allocation3] sm:$0x1] %vm106, %v129
    $region33: #{task_specific_network_forward.1} parent=1 // pred_fallthru
      _
    %v131 = vld [vmem:[#allocation4] sm:$0xff]
    %v132 = vld [vmem:[#allocation2] sm:$0xff]
    %v133 = vld [vmem:[#allocation2 + $0x8] sm:$0xff]
    %v134 = vld [vmem:[#allocation2 + $0x10] sm:$0xff]
    %v135 = vld [vmem:[#allocation2 + $0x18] sm:$0xff]
    %v136 = vld [vmem:[#allocation2 + $0x20] sm:$0xff]
    %v137 = vld [vmem:[#allocation2 + $0x28] sm:$0xff]
    %v138 = vld [vmem:[#allocation2 + $0x30] sm:$0xff]
    %v139 = vld [vmem:[#allocation2 + $0x38] sm:$0xff]
    %v140 = vld [vmem:[#allocation2 + $0x40] sm:$0xff]
    %v141 = vld [vmem:[#allocation2 + $0x48] sm:$0xff]
    %v142 = vld [vmem:[#allocation2 + $0x50] sm:$0xff]
    %v143 = vld [vmem:[#allocation2 + $0x58] sm:$0xff]
    %v144 = vld [vmem:[#allocation2 + $0x60] sm:$0xff]
    %v145 = vld [vmem:[#allocation2 + $0x68] sm:$0xff]
    %v146 = vld [vmem:[#allocation2 + $0x70] sm:$0xff]
    %v147 = vld [vmem:[#allocation2 + $0x78] sm:$0xff]
    %v148 = vld [vmem:[#allocation3] sm:$0x1]
    %v150 = vlaneseq
    %v151 = vshrl.u32 %v150, 7
    %v152 = vsub.s32 0, %v151
    %v153 = vrot.slane %v148, %v152
    %vm155 = vcmask 261120
    %v157 = vsel %vm155, %v131, 0
    %v160 = vsel %vm155, %v132, 0
    %v163 = vsel %vm155, %v133, 0
    %v166 = vsel %vm155, %v134, 0
    %v169 = vsel %vm155, %v135, 0
    %v172 = vsel %vm155, %v136, 0
    %v175 = vsel %vm155, %v137, 0
    %v178 = vsel %vm155, %v138, 0
    %v181 = vsel %vm155, %v139, 0
    %v184 = vsel %vm155, %v140, 0
    %v187 = vsel %vm155, %v141, 0
    %v190 = vsel %vm155, %v142, 0
    %v193 = vsel %vm155, %v143, 0
    %v196 = vsel %vm155, %v144, 0
    %v199 = vsel %vm155, %v145, 0
    %v202 = vsel %vm155, %v146, 0
    %v205 = vsel %vm155, %v147, 0
    %207 = vmatprep.subr.mxu0 0.0
    %208 = vmatpush1.xpose.msra.mxu0 %v160
    %209 = vmatprep.subr.mxu0 0.0
    %210 = vmatpush1.xpose.msra.mxu0 %v163
    %211 = vmatprep.subr.mxu0 0.0
    %212 = vmatpush1.xpose.msra.mxu0 %v166
    %213 = vmatprep.subr.mxu0 0.0
    %214 = vmatpush1.xpose.msra.mxu0 %v169
    %215 = vmatprep.subr.mxu0 0.0
    %216 = vmatpush1.xpose.msra.mxu0 %v172
    %217 = vmatprep.subr.mxu0 0.0
    %218 = vmatpush1.xpose.msra.mxu0 %v175
    %219 = vmatprep.subr.mxu0 0.0
    %220 = vmatpush1.xpose.msra.mxu0 %v178
    %221 = vmatprep.subr.mxu0 0.0
    %222 = vmatpush1.xpose.msra.mxu0 %v181
    %223 = vmatprep.subr.mxu0 0.0
    %224 = vmatpush1.xpose.msra.mxu0 %v184
    %225 = vmatprep.subr.mxu0 0.0
    %226 = vmatpush1.xpose.msra.mxu0 %v187
    %227 = vmatprep.subr.mxu0 0.0
    %228 = vmatpush1.xpose.msra.mxu0 %v190
    %229 = vmatprep.subr.mxu0 0.0
    %230 = vmatpush1.xpose.msra.mxu0 %v193
    %231 = vmatprep.subr.mxu0 0.0
    %232 = vmatpush1.xpose.msra.mxu0 %v196
    %233 = vmatprep.subr.mxu0 0.0
    %234 = vmatpush1.xpose.msra.mxu0 %v199
    %235 = vmatprep.subr.mxu0 0.0
    %236 = vmatpush1.xpose.msra.mxu0 %v202
    %237 = vmatprep.subr.mxu0 0.0
    %238 = vmatpush1.xpose.msra.mxu0 %v205
    %239 = vmatprep.subr.mxu0 0.0
    %240 = vmatpush1.xpose.msra.mxu0 0.0
    %241 = vmatprep.subr.mxu0 0.0
    %242 = vmatpush1.xpose.msra.mxu0 0.0
    %243 = vmatprep.subr.mxu0 0.0
    %244 = vmatpush1.xpose.msra.mxu0 0.0
    %245 = vmatprep.subr.mxu0 0.0
    %246 = vmatpush1.xpose.msra.mxu0 0.0
    %247 = vmatprep.subr.mxu0 0.0
    %248 = vmatpush1.xpose.msra.mxu0 0.0
    %249 = vmatprep.subr.mxu0 0.0
    %250 = vmatpush1.xpose.msra.mxu0 0.0
    %251 = vmatprep.subr.mxu0 0.0
    %252 = vmatpush1.xpose.msra.mxu0 0.0
    %253 = vmatprep.subr.mxu0 0.0
    %254 = vmatpush1.xpose.msra.mxu0 0.0
    %255 = vmatprep.subr.mxu0 0.0
    %256 = vmatpush1.xpose.msra.mxu0 0.0
    %257 = vmatprep.subr.mxu0 0.0
    %258 = vmatpush1.xpose.msra.mxu0 0.0
    %259 = vmatprep.subr.mxu0 0.0
    %260 = vmatpush1.xpose.msra.mxu0 0.0
    %261 = vmatprep.subr.mxu0 0.0
    %262 = vmatpush1.xpose.msra.mxu0 0.0
    %263 = vmatprep.subr.mxu0 0.0
    %264 = vmatpush1.xpose.msra.mxu0 0.0
    %265 = vmatprep.subr.mxu0 0.0
    %266 = vmatpush1.xpose.msra.mxu0 0.0
    %267 = vmatprep.subr.mxu0 0.0
    %268 = vmatpush1.xpose.msra.mxu0 0.0
    %269 = vmatprep.subr.mxu0 0.0
    %270 = vmatpush1.xpose.msra.mxu0 0.0
    %271 = vmatprep.mubr.f32.mxu0 0.0
    %272 = vmatmul.mubr.f32.gmra.mrb[0].mxu0 %v157
    %v273 = vpop.f32.mrb[0].mxu0
    %v274 = vadd.f32 %v153, %v273
    %v275 = vpop.f32.mrb[0].mxu0
    %276 = vdwg.mxu0
    %277 = vst [vmem:[#allocation9] sm:$0xff] %v274
    // Predicated region
    $region34: #{task_specific_network_forward.1} parent=1 // pred_check
      _
    $region35: #{task_specific_network_forward.1} parent=1 // pred_check_branch
      %279 = sbr.rel (0) target = $region37
    $region36: #{task_specific_network_forward.1} parent=1 // pred_region
      %s281 = ssub.s32 128, 128
      %282 = vsyncadd [#allocation6], %s281
      %s284 = sshll.u32 [#allocation9], 4
      %s285 = int_to_ptr.vmem [resolvable:$true] %s284
      %287 = dma.vmem_to_hbm [thread:$0]  %s285, 128, %s5, [#allocation6]
    $region37: #{task_specific_network_forward.1} parent=1 // pred_fallthru
      _
    // Predicated region
    $region38: #{task_specific_network_forward.1} parent=1 // pred_check
      _
    $region39: #{task_specific_network_forward.1} parent=1 // pred_check_branch
      %289 = sbr.rel (0) target = $region41
    $region40: #{task_specific_network_forward.1} parent=1 // pred_region
      %s291 = ssub.s32 256, 256
      %292 = vsyncadd [#allocation11], %s291
      %s293 = sshll.u32 [#allocation10], 4
      %s294 = int_to_ptr.vmem [resolvable:$true] %s293
      %299 = dma.vmem_to_hbm [thread:$0]  %s294, 256, %s6, [#allocation11], 128, 128, 8
    $region41: #{task_specific_network_forward.1} parent=1 // pred_fallthru
      _
    // Predicated region
    $region42: #{task_specific_network_forward.1} parent=1 // pred_check
      _
    $region43: #{task_specific_network_forward.1} parent=1 // pred_check_branch
      %301 = sbr.rel (0) target = $region45
    $region44: #{task_specific_network_forward.1} parent=1 // pred_region
      %s303 = ssub.s32 16, 16
      %304 = vsyncadd [#allocation11], %s303
      %s306 = sshll.u32 [#allocation12], 4
      %s307 = int_to_ptr.vmem [resolvable:$true] %s306
      %309 = dma.vmem_to_hbm [thread:$0]  %s307, 16, %s7, [#allocation11]
    $region45: #{task_specific_network_forward.1} parent=1 // pred_fallthru
      _
    // Predicated region
    $region46: #{task_specific_network_forward.1} parent=1 // pred_check
      _
    $region47: #{task_specific_network_forward.1} parent=1 // pred_check_branch
      %311 = sbr.rel (0) target = $region49
    $region48: #{task_specific_network_forward.1} parent=1 // pred_region
      %312 = dma.done [#allocation6], 128
    $region49: #{task_specific_network_forward.1} parent=1 // pred_fallthru
      _
    // Predicated region
    $region50: #{task_specific_network_forward.1} parent=1 // pred_check
      _
    $region51: #{task_specific_network_forward.1} parent=1 // pred_check_branch
      %314 = sbr.rel (0) target = $region53
    $region52: #{task_specific_network_forward.1} parent=1 // pred_region
      %315 = dma.done [#allocation11], 256
    $region53: #{task_specific_network_forward.1} parent=1 // pred_fallthru
      _
    // Predicated region
    $region54: #{task_specific_network_forward.1} parent=1 // pred_check
      _
    $region55: #{task_specific_network_forward.1} parent=1 // pred_check_branch
      %317 = sbr.rel (0) target = $region57
    $region56: #{task_specific_network_forward.1} parent=1 // pred_region
      %318 = dma.done [#allocation11], 16
    $region57: #{task_specific_network_forward.1} parent=1 // pred_fallthru
      _
    %319 = vsyncpa [#allocation5], 1
    %320 = vsyncpa [#allocation8], 1
    %321 = vsyncpa [#allocation6], 1
    %322 = vsyncpa [#allocation11], 1

</llo_original>
